<compile_context>
chip_gen: v7x
topology: tpu7x:2x2x1
jax: 0.10.0
libtpu: 0.0.40
codegen_flags: <defaults>
</compile_context>

<pallas_src>
import jax
import jax.numpy as jnp
from jax.experimental import pallas as pl
from jax.experimental.pallas import tpu as pltpu


def _round_up(n: int, m: int) -> int:
    return ((n + m - 1) // m) * m


def _vmem_cap_bytes() -> int:
    # Leave headroom: ~75% of physical per-core VMEM if we can query it,
    # otherwise assume the smallest generation (v7x: 64 MiB/TC) -> 48 MiB.
    try:
        info = pltpu.get_tpu_info()
        phys = getattr(info, "vmem_capacity_bytes", None)
        if phys:
            return int(phys) * 3 // 4
    except Exception:
        pass
    return 48 << 20


def _choose_token_tile(B: int, T: int, H: int, O: int, itemsize: int,
                       vmem_cap: int) -> int:
    def est(t):
        x_tile = t * H * itemsize
        o_tile = t * O * itemsize
        w_tile = H * O * itemsize
        b_tile = O * 4
        f32_tmp = 3 * t * H * 4          # in-kernel f32 upcasts/intermediates
        return 2 * (x_tile + o_tile + w_tile + b_tile) + f32_tmp + (4 << 20)

    tT = min(1024, _round_up(T, 8))
    # Fit the (f32-temp-inclusive) budget.
    while tT > 8 and est(tT) > vmem_cap:
        tT = max(8, _round_up(tT // 2, 8))
    # Keep enough grid steps to feed both TensorCores on v7x.
    while tT > 8 and B * ((T + tT - 1) // tT) < 4:
        tT = max(8, _round_up(tT // 2, 8))
    return tT


def final_layer_kernel(x_ref, w_ref, b_ref, o_ref):
    # Per-grid-step views:
    #   x_ref : (tT, H)   token tile of one batch element
    #   w_ref : (H, O)    per-batch folded weight  (1+scale_b) ⊙ W^T
    #   b_ref : (1, O)    per-batch folded bias    shift_b @ W^T + b   (f32)
    #   o_ref : (tT, O)   output tile (true O, no lane padding)
    x = x_ref[...].astype(jnp.float32)

    # One-pass LayerNorm statistics: var = E[x^2] - mean^2  (eps = 1e-6).
    mean = jnp.mean(x, axis=-1, keepdims=True)
    mean_sq = jnp.mean(x * x, axis=-1, keepdims=True)
    var = mean_sq - mean * mean
    rstd = jax.lax.rsqrt(var + 1e-6)
    xn = (x - mean) * rstd                                   # (tT, H) f32

    # Modulation + linear are both inside this single MXU matmul (folded W').
    xn = xn.astype(w_ref.dtype)
    out = jnp.dot(xn, w_ref[...], preferred_element_type=jnp.float32)
    out = out + b_ref[...].astype(jnp.float32)
    o_ref[...] = out.astype(o_ref.dtype)


def final_layer_forward(x, c, w_ada, b_ada, w_lin, b_lin):
    """x: (B, T, H); c: (B, H); w_ada: (2H, H); b_ada: (2H,);
    w_lin: (O, H); b_lin: (O,).  Returns (B, T, O)."""
    B, T, H = x.shape
    O = w_lin.shape[0]
    compute_dtype = x.dtype

    # ---- adaLN modulation + weight folding in the wrapper (tiny XLA work) ----
    c32 = c.astype(jnp.float32)
    silu_c = c32 * jax.nn.sigmoid(c32)
    mod = silu_c @ w_ada.astype(jnp.float32).T + b_ada.astype(jnp.float32)
    shift, scale = mod[:, :H], mod[:, H:]                    # (B, H) f32 each

    w_t = jnp.transpose(w_lin).astype(jnp.float32)           # (H, O)
    w_fold = ((1.0 + scale)[:, :, None] * w_t[None, :, :])   # (B, H, O)
    w_fold = w_fold.astype(compute_dtype)
    b_fold = (shift @ w_t + b_lin.astype(jnp.float32)).reshape(B, 1, O)  # f32

    # ---- token tiling (ragged-safe, no jnp.pad of x) --------------------------
    itemsize = jnp.dtype(compute_dtype).itemsize
    vmem_cap = _vmem_cap_bytes()
    tT = _choose_token_tile(B, T, H, O, itemsize, vmem_cap)
    n_t = (T + tT - 1) // tT

    # ---- VMEM budget: double-buffered tiles + whole-tile f32 temporaries -----
    x_tile_b = tT * H * itemsize
    o_tile_b = tT * O * itemsize
    w_tile_b = H * O * itemsize
    f32_tmp_b = 3 * tT * H * 4
    vmem_est = 2 * (x_tile_b + o_tile_b + w_tile_b + O * 4) + f32_tmp_b + (4 << 20)
    vmem_limit = int(min(max(vmem_est, 16 << 20), vmem_cap))

    grid_spec = pltpu.PrefetchScalarGridSpec(
        num_scalar_prefetch=0,
        grid=(B, n_t),
        in_specs=[
            # x tile: squeeze batch so the kernel sees (tT, H)
            pl.BlockSpec((pl.Squeezed(), tT, H), lambda b, t: (b, t, 0)),
            # per-batch folded weight (H, O); re-DMA'd only when b changes
            pl.BlockSpec((pl.Squeezed(), H, O), lambda b, t: (b, 0, 0)),
            # per-batch folded bias (1, O)
            pl.BlockSpec((pl.Squeezed(), 1, O), lambda b, t: (b, 0, 0)),
        ],
        out_specs=pl.BlockSpec((pl.Squeezed(), tT, O), lambda b, t: (b, t, 0)),
    )

    return pl.pallas_call(
        final_layer_kernel,
        out_shape=jax.ShapeDtypeStruct((B, T, O), x.dtype),
        grid_spec=grid_spec,
        compiler_params=pltpu.CompilerParams(
            dimension_semantics=("parallel", "parallel"),
            vmem_limit_bytes=vmem_limit,
        ),
    )(x, w_fold, b_fold)


def reference_forward(x, c, w_ada, b_ada, w_lin, b_lin):
    """Pure-JAX reference matching the PyTorch FinalLayer exactly."""
    silu = c * jax.nn.sigmoid(c)
    mod = silu @ w_ada.T + b_ada
    H = x.shape[-1]
    shift, scale = mod[:, :H], mod[:, H:]
    mean = jnp.mean(x, axis=-1, keepdims=True)
    var = jnp.mean((x - mean) ** 2, axis=-1, keepdims=True)
    xn = (x - mean) / jnp.sqrt(var + 1e-6)
    xm = xn * (1 + scale[:, None, :]) + shift[:, None, :]
    return xm @ w_lin.T + b_lin


if __name__ == "__main__":
    # Small shapes consistent with FinalLayer(hidden_size=32, patch_size=2, out_channels=4)
    B, T, H = 2, 8, 32
    patch_size, out_channels = 2, 4
    O = patch_size * patch_size * out_channels  # 16

    key = jax.random.PRNGKey(0)
    kx, kc, kwa, kba, kwl, kbl = jax.random.split(key, 6)

    x = jax.random.normal(kx, (B, T, H), dtype=jnp.float32)
    c = jax.random.normal(kc, (B, H), dtype=jnp.float32)

    w_ada = 0.05 * jax.random.normal(kwa, (2 * H, H), dtype=jnp.float32)
    b_ada = 0.01 * jax.random.normal(kba, (2 * H,), dtype=jnp.float32)
    w_lin = 0.05 * jax.random.normal(kwl, (O, H), dtype=jnp.float32)
    b_lin = 0.01 * jax.random.normal(kbl, (O,), dtype=jnp.float32)

    out = final_layer_forward(x, c, w_ada, b_ada, w_lin, b_lin)
    out = jax.block_until_ready(out)

    ref = reference_forward(x, c, w_ada, b_ada, w_lin, b_lin)
    assert out.shape == (B, T, O)
    assert jnp.allclose(out, ref, atol=1e-4, rtol=1e-4), "mismatch vs reference"

    print("KERNEL_OK")
</pallas_src>

<mosaic_0001>
module attributes {stable_mosaic.version = 11 : i64} {
  func.func @final_layer_kernel(%arg0: i32, %arg1: i32, %arg2: memref<1x8x32xf32, #tpu.memory_space<vmem>>, %arg3: memref<1x32x16xf32, #tpu.memory_space<vmem>>, %arg4: memref<1x1x16xf32, #tpu.memory_space<vmem>>, %arg5: memref<1x8x16xf32, #tpu.memory_space<vmem>>) attributes {dimension_semantics = [#tpu.dimension_semantics<parallel>, #tpu.dimension_semantics<parallel>], iteration_bounds = array<i64: 2, 1>, scalar_prefetch = 0 : i64, scratch_operands = 0 : i64, tpu.core_type = #tpu.core_type<tc>, window_params = [{transform_indices = @transform_0, window_bounds = array<i64: 1, 8, 32>}, {transform_indices = @transform_1, window_bounds = array<i64: 1, 32, 16>}, {transform_indices = @transform_2, window_bounds = array<i64: 1, 1, 16>}, {transform_indices = @transform_3, window_bounds = array<i64: 1, 8, 16>}]} {
    %c0 = arith.constant 0 : index
    %c0_0 = arith.constant 0 : index
    %c0_1 = arith.constant 0 : index
    %0 = vector.load %arg2[%c0, %c0_0, %c0_1] : memref<1x8x32xf32, #tpu.memory_space<vmem>>, vector<1x8x32xf32>
    %1 = vector.shape_cast %0 : vector<1x8x32xf32> to vector<8x32xf32>
    %cst = arith.constant dense<0.000000e+00> : vector<8xf32>
    %2 = vector.multi_reduction <add>, %1, %cst [1] : vector<8x32xf32> to vector<8xf32>
    %3 = vector.shape_cast %2 : vector<8xf32> to vector<8x1xf32>
    %cst_2 = arith.constant 3.200000e+01 : f32
    %4 = vector.broadcast %cst_2 : f32 to vector<8x1xf32>
    %5 = arith.divf %3, %4 : vector<8x1xf32>
    %6 = arith.mulf %1, %1 : vector<8x32xf32>
    %cst_3 = arith.constant dense<0.000000e+00> : vector<8xf32>
    %7 = vector.multi_reduction <add>, %6, %cst_3 [1] : vector<8x32xf32> to vector<8xf32>
    %8 = vector.shape_cast %7 : vector<8xf32> to vector<8x1xf32>
    %cst_4 = arith.constant 3.200000e+01 : f32
    %9 = vector.broadcast %cst_4 : f32 to vector<8x1xf32>
    %10 = arith.divf %8, %9 : vector<8x1xf32>
    %11 = arith.mulf %5, %5 : vector<8x1xf32>
    %12 = arith.subf %10, %11 : vector<8x1xf32>
    %cst_5 = arith.constant 9.99999997E-7 : f32
    %13 = vector.broadcast %cst_5 : f32 to vector<8x1xf32>
    %14 = arith.addf %12, %13 : vector<8x1xf32>
    %15 = math.rsqrt %14 : vector<8x1xf32>
    %16 = vector.broadcast %5 : vector<8x1xf32> to vector<8x32xf32>
    %17 = arith.subf %1, %16 : vector<8x32xf32>
    %18 = vector.broadcast %15 : vector<8x1xf32> to vector<8x32xf32>
    %19 = arith.mulf %17, %18 : vector<8x32xf32>
    %c0_6 = arith.constant 0 : index
    %c0_7 = arith.constant 0 : index
    %c0_8 = arith.constant 0 : index
    %20 = vector.load %arg3[%c0_6, %c0_7, %c0_8] : memref<1x32x16xf32, #tpu.memory_space<vmem>>, vector<1x32x16xf32>
    %21 = vector.shape_cast %20 : vector<1x32x16xf32> to vector<32x16xf32>
    %cst_9 = arith.constant dense<0.000000e+00> : vector<8x16xf32>
    %22 = tpu.matmul %19, %21, %cst_9 {dimension_numbers = #tpu.dot_dimension_numbers<[1], [0], [0], [1], [0, 0, 1, 1], [], []>} : vector<8x32xf32>, vector<32x16xf32>, vector<8x16xf32> -> vector<8x16xf32>
    %c0_10 = arith.constant 0 : index
    %c0_11 = arith.constant 0 : index
    %c0_12 = arith.constant 0 : index
    %23 = vector.load %arg4[%c0_10, %c0_11, %c0_12] : memref<1x1x16xf32, #tpu.memory_space<vmem>>, vector<1x1x16xf32>
    %24 = vector.shape_cast %23 : vector<1x1x16xf32> to vector<1x16xf32>
    %25 = vector.broadcast %24 : vector<1x16xf32> to vector<8x16xf32>
    %26 = arith.addf %22, %25 : vector<8x16xf32>
    %c0_13 = arith.constant 0 : index
    %c0_14 = arith.constant 0 : index
    %c0_15 = arith.constant 0 : index
    %27 = vector.load %arg5[%c0_13, %c0_14, %c0_15] : memref<1x8x16xf32, #tpu.memory_space<vmem>>, vector<1x8x16xf32>
    %28 = vector.shape_cast %27 : vector<1x8x16xf32> to vector<8x16xf32>
    %29 = vector.shape_cast %26 : vector<8x16xf32> to vector<1x8x16xf32>
    tpu.vector_store %arg5[%c0_13, %c0_14, %c0_15], %29 {strides = array<i32>} : memref<1x8x16xf32, #tpu.memory_space<vmem>>, vector<1x8x16xf32>,
    return
  }
  func.func @transform_0(%arg0: i32, %arg1: i32) -> (i32, i32, i32) {
    %c0_i32 = arith.constant 0 : i32
    %c0_i32_0 = arith.constant 0 : i32
    return %arg0, %arg1, %c0_i32 : i32, i32, i32
  }
  func.func @transform_1(%arg0: i32, %arg1: i32) -> (i32, i32, i32) {
    %c0_i32 = arith.constant 0 : i32
    %c0_i32_0 = arith.constant 0 : i32
    %c0_i32_1 = arith.constant 0 : i32
    return %arg0, %c0_i32, %c0_i32_0 : i32, i32, i32
  }
  func.func @transform_2(%arg0: i32, %arg1: i32) -> (i32, i32, i32) {
    %c0_i32 = arith.constant 0 : i32
    %c0_i32_0 = arith.constant 0 : i32
    %c0_i32_1 = arith.constant 0 : i32
    return %arg0, %c0_i32, %c0_i32_0 : i32, i32, i32
  }
  func.func @transform_3(%arg0: i32, %arg1: i32) -> (i32, i32, i32) {
    %c0_i32 = arith.constant 0 : i32
    %c0_i32_0 = arith.constant 0 : i32
    return %arg0, %arg1, %c0_i32 : i32, i32, i32
  }
}

</mosaic_0001>

<llo_original>
// kernel: tpu_custom_call.1
$region0: #{tpu_custom_call.1}
  #allocation0 [shape = 'u32[]', space=smem, size = 0x4, offset = 0x4, fixed_abs, tag = 'smem constant byte address 0x4 - core index']
  #allocation1 [shape = 'u32[144,128]{1,0:T(1,128)}', space=vmem, size = 0x12000, scoped, tag = 'internal scratch']
  %s0 = inlined_call_operand.vmem [shape: f32[2,8,32], index: 0, kind: input, shape index: {}]
  %s1 = inlined_call_operand.vmem [shape: f32[2,32,16], index: 1, kind: input, shape index: {}]
  %s2 = inlined_call_operand.vmem [shape: f32[2,1,16], index: 2, kind: input, shape index: {}]
  %s3 = inlined_call_operand.hbm [shape: f32[2,8,16], index: 3, kind: output, shape index: {}]
  %s4 = sld [smem:[#allocation0]]
  $region45: #{tpu_custom_call.1} parent=0
    _
  %s6 = ssub.s32 1, %s4
  %s7 = scalar_select 0, %s6, %s4
  $region1: #{tpu_custom_call.1} parent=0
    #allocation2 [shape = 'u8[8192]{0}', space=vmem, size = 0x2000, scoped, tag = 'output window, operand 0']
    #allocation3 [shape = 's32[2]{0}', space=sflag, size = 0x8, scoped, tag = 'scoped memory for tpu_custom_call.1']
    %8 = vsyncpa [#allocation3], 0
    %s9 = scalar_lea.sflag [#allocation3], 1
    %10 = vsyncpa %s9, 0
    loop: start=0, step=1, limit=4
    $region2: #{tpu_custom_call.1} parent=1 // loop_pre_header
      _
    $region3: #{tpu_custom_call.1} parent=1 // loop_header
      %s12 = sphi 0, %s16
      %p13 = scmp.ge.s32.totalorder %s12, 4
      %s19 = sphi 0, %s31
      %s20 = sphi 0, %s27
      %s21 = sphi 0, %s19
      %s22 = sphi 0, %s20
      %s23 = sphi 0, %s21
      %s24 = sphi 0, %s22
      %s36 = sphi 0, %s38
      %s39 = sphi 0, %s36
      %s40 = sphi 0, %s39
      %s56 = sphi 0, %s40
      %s62 = sphi 0, %s64
      %s65 = sphi 0, %s62
      %s66 = sphi 0, %s65
      %s82 = sphi 0, %s66
      %s88 = sphi 0, %s90
      %s91 = sphi 0, %s88
      %s92 = sphi 0, %s91
      %s108 = sphi 0, %s92
      %s116 = sphi 0, %s118
      %s119 = sphi 0, %s116
      %s120 = sphi 0, %s119
      %s136 = sphi 0, %s120
    $region4: #{tpu_custom_call.1} parent=1 // loop_header_branch
      %15 = sbr.rel (%p13) target = $region8
    $region5: #{tpu_custom_call.1} parent=1 // loop_body
      %s17 = ssub.s32 %s12, 1
      %s18 = ssub.s32 %s12, 2
      %s25 = sadd.s32 1, %s20
      %p26 = scmp.ge.s32.totalorder %s25, 1
      %s27 = scalar_select %p26, 0, %s25
      %s28 = sadd.s32 1, %s19
      %s29 = scalar_select %p26, %s28, %s19
      %p30 = scmp.ge.s32.totalorder %s29, 2
      %s31 = scalar_select %p30, 0, %s29
      %s32 = ssub.s32 %s19, %s31
      %s33 = ssub.s32 %s20, %s27
      %s34 = sor.u32 %s32, %s33
      %p35 = scmp.eq.s32.totalorder %s34, 0
      %s37 = sadd.s32 %s36, 1
      %s38 = scalar_select %p35, %s36, %s37
      %p41 = pneg %p35
      %p42 = scmp.eq.s32.totalorder %s12, 1
      %p43 = por %p41, %p42
      %p44 = scmp.ne.s32.totalorder %s36, %s39
      %p45 = scmp.eq.s32.totalorder %s12, 0
      %p46 = por %p44, %p45
      %p47 = scmp.ne.s32.totalorder %s36, %s39
      %p48 = scmp.eq.s32.totalorder %s17, 1
      %p49 = por %p47, %p48
      %p50 = scmp.ne.s32.totalorder %s39, %s40
      %p51 = scmp.eq.s32.totalorder %s17, 0
      %p52 = por %p50, %p51
      %p53 = scmp.ne.s32.totalorder %s39, %s40
      %p54 = scmp.eq.s32.totalorder %s18, 1
      %p55 = por %p53, %p54
      %p57 = scmp.ne.s32.totalorder %s40, %s56
      %p58 = scmp.eq.s32.totalorder %s18, 0
      %p59 = por %p57, %p58
      %s60 = ssub.s32 %s19, %s31
      %p61 = scmp.eq.s32.totalorder %s60, 0
      %s63 = sadd.s32 %s62, 1
      %s64 = scalar_select %p61, %s62, %s63
      %p67 = pneg %p61
      %p68 = scmp.eq.s32.totalorder %s12, 1
      %p69 = por %p67, %p68
      %p70 = scmp.ne.s32.totalorder %s62, %s65
      %p71 = scmp.eq.s32.totalorder %s12, 0
      %p72 = por %p70, %p71
      %p73 = scmp.ne.s32.totalorder %s62, %s65
      %p74 = scmp.eq.s32.totalorder %s17, 1
      %p75 = por %p73, %p74
      %p76 = scmp.ne.s32.totalorder %s65, %s66
      %p77 = scmp.eq.s32.totalorder %s17, 0
      %p78 = por %p76, %p77
      %p79 = scmp.ne.s32.totalorder %s65, %s66
      %p80 = scmp.eq.s32.totalorder %s18, 1
      %p81 = por %p79, %p80
      %p83 = scmp.ne.s32.totalorder %s66, %s82
      %p84 = scmp.eq.s32.totalorder %s18, 0
      %p85 = por %p83, %p84
      %s86 = ssub.s32 %s19, %s31
      %p87 = scmp.eq.s32.totalorder %s86, 0
      %s89 = sadd.s32 %s88, 1
      %s90 = scalar_select %p87, %s88, %s89
      %p93 = pneg %p87
      %p94 = scmp.eq.s32.totalorder %s12, 1
      %p95 = por %p93, %p94
      %p96 = scmp.ne.s32.totalorder %s88, %s91
      %p97 = scmp.eq.s32.totalorder %s12, 0
      %p98 = por %p96, %p97
      %p99 = scmp.ne.s32.totalorder %s88, %s91
      %p100 = scmp.eq.s32.totalorder %s17, 1
      %p101 = por %p99, %p100
      %p102 = scmp.ne.s32.totalorder %s91, %s92
      %p103 = scmp.eq.s32.totalorder %s17, 0
      %p104 = por %p102, %p103
      %p105 = scmp.ne.s32.totalorder %s91, %s92
      %p106 = scmp.eq.s32.totalorder %s18, 1
      %p107 = por %p105, %p106
      %p109 = scmp.ne.s32.totalorder %s92, %s108
      %p110 = scmp.eq.s32.totalorder %s18, 0
      %p111 = por %p109, %p110
      %s112 = ssub.s32 %s19, %s31
      %s113 = ssub.s32 %s20, %s27
      %s114 = sor.u32 %s112, %s113
      %p115 = scmp.eq.s32.totalorder %s114, 0
      %s117 = sadd.s32 %s116, 1
      %s118 = scalar_select %p115, %s116, %s117
      %p121 = pneg %p115
      %p122 = scmp.eq.s32.totalorder %s12, 1
      %p123 = por %p121, %p122
      %p124 = scmp.ne.s32.totalorder %s116, %s119
      %p125 = scmp.eq.s32.totalorder %s12, 0
      %p126 = por %p124, %p125
      %p127 = scmp.ne.s32.totalorder %s116, %s119
      %p128 = scmp.eq.s32.totalorder %s17, 1
      %p129 = por %p127, %p128
      %p130 = scmp.ne.s32.totalorder %s119, %s120
      %p131 = scmp.eq.s32.totalorder %s17, 0
      %p132 = por %p130, %p131
      %p133 = scmp.ne.s32.totalorder %s119, %s120
      %p134 = scmp.eq.s32.totalorder %s18, 1
      %p135 = por %p133, %p134
      %p137 = scmp.ne.s32.totalorder %s120, %s136
      %p138 = scmp.eq.s32.totalorder %s18, 0
      %p139 = por %p137, %p138
      %p140 = scmp.le.s32.totalorder 1, %s12
      %p141 = scmp.lt.s32.totalorder %s12, 3
      %p142 = pnand %p140, %p141
      %p143 = pneg %p142
      // Predicated region
      $region9: #{tpu_custom_call.1} parent=5 // pred_check
        _
      $region10: #{tpu_custom_call.1} parent=5 // pred_check_branch
        %145 = sbr.rel (%p142) target = $region12
      $region11: #{tpu_custom_call.1} parent=5 // pred_region
        %s146 = ssub.s32 %s12, 1
      $region12: #{tpu_custom_call.1} parent=5 // pred_fallthru
        _
      %p147 = scmp.lt.s32.totalorder %s12, 2
      // Predicated region
      $region13: #{tpu_custom_call.1} parent=5 // pred_check
        %p148 = pneg %p147
      $region14: #{tpu_custom_call.1} parent=5 // pred_check_branch
        %150 = sbr.rel (%p148) target = $region16
      $region15: #{tpu_custom_call.1} parent=5 // pred_region
        // Predicated region
        $region17: #{tpu_custom_call.1} parent=15 // pred_check
          %p151 = pneg %p46
        $region18: #{tpu_custom_call.1} parent=15 // pred_check_branch
          %153 = sbr.rel (%p151) target = $region20
        $region19: #{tpu_custom_call.1} parent=15 // pred_region
          %p154 = scmp.lt.s32.totalorder %s19, 1
          %s155 = scalar_select %p154, %s19, 1
          %p156 = scmp.lt.s32.totalorder %s20, 0
          %s157 = scalar_select %p156, %s20, 0
          %s158 = sadd.s32 %s157, %s155
          %s159 = smul.addr %s158, 8
          %s160 = scalar_lea.vmem %s0, %s159
        $region20: #{tpu_custom_call.1} parent=15 // pred_fallthru
          _
        // Predicated region
        $region21: #{tpu_custom_call.1} parent=15 // pred_check
          %p161 = pneg %p72
        $region22: #{tpu_custom_call.1} parent=15 // pred_check_branch
          %163 = sbr.rel (%p161) target = $region24
        $region23: #{tpu_custom_call.1} parent=15 // pred_region
          %p164 = scmp.lt.s32.totalorder %s19, 1
          %s165 = scalar_select %p164, %s19, 1
          %s166 = smul.addr %s165, 4
          %s167 = smul.addr %s166, 8
          %s168 = scalar_lea.vmem %s1, %s167
        $region24: #{tpu_custom_call.1} parent=15 // pred_fallthru
          _
        // Predicated region
        $region25: #{tpu_custom_call.1} parent=15 // pred_check
          %p169 = pneg %p98
        $region26: #{tpu_custom_call.1} parent=15 // pred_check_branch
          %171 = sbr.rel (%p169) target = $region28
        $region27: #{tpu_custom_call.1} parent=15 // pred_region
          %p172 = scmp.lt.s32.totalorder %s19, 1
          %s173 = scalar_select %p172, %s19, 1
          %s174 = scalar_lea.vmem %s2, %s173
        $region28: #{tpu_custom_call.1} parent=15 // pred_fallthru
          _
      $region16: #{tpu_custom_call.1} parent=5 // pred_fallthru
        _
      %p175 = scmp.le.s32.totalorder 1, %s12
      %p176 = scmp.lt.s32.totalorder %s12, 3
      %p177 = pnand %p175, %p176
      %p178 = pneg %p177
      // Predicated region
      $region29: #{tpu_custom_call.1} parent=5 // pred_check
        _
      $region30: #{tpu_custom_call.1} parent=5 // pred_check_branch
        %180 = sbr.rel (%p177) target = $region32
      $region31: #{tpu_custom_call.1} parent=5 // pred_region
        %s181 = ssub.s32 %s12, 1
        %p182 = scmp.lt.s32.totalorder %s21, 1
        %s183 = scalar_select %p182, %s21, 1
        %p184 = scmp.lt.s32.totalorder %s22, 0
        %s185 = scalar_select %p184, %s22, 0
        %s186 = sadd.s32 %s185, %s183
        %s187 = smul.addr %s186, 8
        %s188 = scalar_lea.vmem %s0, %s187
        %p189 = pneg %p52
        %p190 = pneg %p49
        %p191 = scmp.lt.s32.totalorder %s21, 1
        %s192 = scalar_select %p191, %s21, 1
        %s193 = smul.addr %s192, 4
        %s194 = smul.addr %s193, 8
        %s195 = scalar_lea.vmem %s1, %s194
        %p196 = pneg %p78
        %p197 = pneg %p75
        %p198 = scmp.lt.s32.totalorder %s21, 1
        %s199 = scalar_select %p198, %s21, 1
        %s200 = scalar_lea.vmem %s2, %s199
        %p201 = pneg %p104
        %p202 = pneg %p101
        %p203 = pneg %p132
        %p204 = pneg %p129
        %s205 = sand.u32 %s119, 1
        %s206 = scalar_lea.sflag [#allocation3], %s205
        %s207 = sand.u32 %s119, 1
        %s208 = smul.addr %s207, 8
        %s209 = scalar_lea.vmem [#allocation2], %s208
        %p210 = scmp.lt.s32.totalorder %s21, 1
        %s211 = scalar_select %p210, %s21, 1
        %p212 = scmp.lt.s32.totalorder %s22, 0
        %s213 = scalar_select %p212, %s22, 0
        %s214 = sadd.s32 %s213, %s211
        %s215 = smul.addr %s214, 8
        %s216 = scalar_lea.vmem %s0, %s215
        %p217 = scmp.lt.s32.totalorder %s21, 1
        %s218 = scalar_select %p217, %s21, 1
        %s219 = smul.addr %s218, 4
        %s220 = smul.addr %s219, 8
        %s221 = scalar_lea.vmem %s1, %s220
        %p222 = scmp.lt.s32.totalorder %s21, 1
        %s223 = scalar_select %p222, %s21, 1
        %s224 = scalar_lea.vmem %s2, %s223
        %v225 = vld [vmem:[%s216] sm:$0xff]
        %vm226 = vcmask 261120
        %v227 = vsel %vm226, %v225, 0.0
        %228 = vadd.xlane.f32.xlu0 %v227
        %v229 = vpop.xlane.xlu0 %228
        %v230 = vrcp.pop 32.0
        %v231 = vmul.f32 %v229, %v230
        %v232 = vmul.f32 %v225, %v225
        %v233 = vsel %vm226, %v232, 0.0
        %234 = vadd.xlane.f32.xlu0 %v233
        %v235 = vpop.xlane.xlu0 %234
        %v236 = vmul.f32 %v235, %v230
        %v237 = vmul.f32 %v231, %v231
        %v238 = vsub.f32 %v236, %v237
        %v239 = vadd.f32 %v238, 1e-06
        %v240 = vrsqrt.pop %v239
        %v241 = vsub.f32 %v225, %v231
        %v242 = vmul.f32 %v241, %v240
        %v243 = vld [vmem:[%s221] sm:$0xff]
        %v244 = vld [vmem:[%s221 + $0x8] sm:$0xff]
        %v245 = vld [vmem:[%s221 + $0x10] sm:$0xff]
        %v246 = vld [vmem:[%s221 + $0x18] sm:$0xff]
        %v247 = vld [vmem:[%s224] sm:$0x1]
        %v249 = vlaneseq
        %v250 = vshrl.u32 %v249, 7
        %v251 = vsub.s32 0, %v250
        %v252 = vrot.slane %v247, %v251
        %v255 = vsel %vm226, %v242, 0
        %257 = vmatprep.subr.mxu0 0.0
        %258 = vmatpush1.msra.mxu0 %v243
        %259 = vmatprep.subr.mxu0 0.0
        %260 = vmatpush1.msra.mxu0 %v244
        %261 = vmatprep.subr.mxu0 0.0
        %262 = vmatpush1.msra.mxu0 %v245
        %263 = vmatprep.subr.mxu0 0.0
        %264 = vmatpush1.msra.mxu0 %v246
        %265 = vmatprep.subr.mxu0 0.0
        %266 = vmatpush1.msra.mxu0 0.0
        %267 = vmatprep.subr.mxu0 0.0
        %268 = vmatpush1.msra.mxu0 0.0
        %269 = vmatprep.subr.mxu0 0.0
        %270 = vmatpush1.msra.mxu0 0.0
        %271 = vmatprep.subr.mxu0 0.0
        %272 = vmatpush1.msra.mxu0 0.0
        %273 = vmatprep.subr.mxu0 0.0
        %274 = vmatpush1.msra.mxu0 0.0
        %275 = vmatprep.subr.mxu0 0.0
        %276 = vmatpush1.msra.mxu0 0.0
        %277 = vmatprep.subr.mxu0 0.0
        %278 = vmatpush1.msra.mxu0 0.0
        %279 = vmatprep.subr.mxu0 0.0
        %280 = vmatpush1.msra.mxu0 0.0
        %281 = vmatprep.subr.mxu0 0.0
        %282 = vmatpush1.msra.mxu0 0.0
        %283 = vmatprep.subr.mxu0 0.0
        %284 = vmatpush1.msra.mxu0 0.0
        %285 = vmatprep.subr.mxu0 0.0
        %286 = vmatpush1.msra.mxu0 0.0
        %287 = vmatprep.subr.mxu0 0.0
        %288 = vmatpush1.msra.mxu0 0.0
        %289 = vmatprep.subr.mxu0 0.0
        %290 = vmatpush1.msra.mxu0 0.0
        %291 = vmatprep.subr.mxu0 0.0
        %292 = vmatpush1.msra.mxu0 0.0
        %293 = vmatprep.subr.mxu0 0.0
        %294 = vmatpush1.msra.mxu0 0.0
        %295 = vmatprep.subr.mxu0 0.0
        %296 = vmatpush1.msra.mxu0 0.0
        %297 = vmatprep.subr.mxu0 0.0
        %298 = vmatpush1.msra.mxu0 0.0
        %299 = vmatprep.subr.mxu0 0.0
        %300 = vmatpush1.msra.mxu0 0.0
        %301 = vmatprep.subr.mxu0 0.0
        %302 = vmatpush1.msra.mxu0 0.0
        %303 = vmatprep.subr.mxu0 0.0
        %304 = vmatpush1.msra.mxu0 0.0
        %305 = vmatprep.subr.mxu0 0.0
        %306 = vmatpush1.msra.mxu0 0.0
        %307 = vmatprep.subr.mxu0 0.0
        %308 = vmatpush1.msra.mxu0 0.0
        %309 = vmatprep.subr.mxu0 0.0
        %310 = vmatpush1.msra.mxu0 0.0
        %311 = vmatprep.subr.mxu0 0.0
        %312 = vmatpush1.msra.mxu0 0.0
        %313 = vmatprep.subr.mxu0 0.0
        %314 = vmatpush1.msra.mxu0 0.0
        %315 = vmatprep.subr.mxu0 0.0
        %316 = vmatpush1.msra.mxu0 0.0
        %317 = vmatprep.subr.mxu0 0.0
        %318 = vmatpush1.msra.mxu0 0.0
        %319 = vmatprep.subr.mxu0 0.0
        %320 = vmatpush1.msra.mxu0 0.0
        %321 = vmatprep.mubr.f32.mxu0 0.0
        %322 = vmatmul.mubr.f32.gmra.mrb[0].mxu0 %v255
        %v323 = vpop.f32.mrb[0].mxu0
        %v324 = vadd.f32 %v252, %v323
        %v325 = vpop.f32.mrb[0].mxu0
        %326 = vdwg.mxu0
        %vm327 = vcmask 130048
        %328 = vst.msk [vmem:[%s209] sm:$0xff] %vm327, %v324
        %s329 = sand.u32 %s119, 1
        %s330 = scalar_lea.sflag [#allocation3], %s329
        %s331 = sand.u32 %s119, 1
        %s332 = smul.addr %s331, 8
        %s333 = scalar_lea.vmem [#allocation2], %s332
        // Predicated region
        $region33: #{tpu_custom_call.1} parent=31 // pred_check
          %p334 = pneg %p129
        $region34: #{tpu_custom_call.1} parent=31 // pred_check_branch
          %336 = sbr.rel (%p334) target = $region36
        $region35: #{tpu_custom_call.1} parent=31 // pred_region
          %s338 = ssub.s32 128, 128
          %339 = vsyncadd %s330, %s338
          %s340 = sadd.s32 %s22, %s21
          %s341 = smul.addr %s340, 128
          %s342 = scalar_lea.hbm %s3, %s341
          %s344 = sshll.u32 %s333, 4
          %s345 = int_to_ptr.vmem [resolvable:$true] %s344
          %347 = dma.vmem_to_hbm [thread:$0]  %s345, 128, %s342, %s330
        $region36: #{tpu_custom_call.1} parent=31 // pred_fallthru
          _
      $region32: #{tpu_custom_call.1} parent=5 // pred_fallthru
        _
      %p348 = scmp.le.s32.totalorder 2, %s12
      // Predicated region
      $region37: #{tpu_custom_call.1} parent=5 // pred_check
        %p349 = pneg %p348
      $region38: #{tpu_custom_call.1} parent=5 // pred_check_branch
        %351 = sbr.rel (%p349) target = $region40
      $region39: #{tpu_custom_call.1} parent=5 // pred_region
        %s352 = ssub.s32 %s12, 2
        // Predicated region
        $region41: #{tpu_custom_call.1} parent=39 // pred_check
          %p353 = pneg %p135
        $region42: #{tpu_custom_call.1} parent=39 // pred_check_branch
          %355 = sbr.rel (%p353) target = $region44
        $region43: #{tpu_custom_call.1} parent=39 // pred_region
          %s356 = sand.u32 %s120, 1
          %s357 = scalar_lea.sflag [#allocation3], %s356
          %s358 = sand.u32 %s120, 1
          %s359 = smul.addr %s358, 8
          %s360 = scalar_lea.vmem [#allocation2], %s359
          %361 = dma.done %s357, 128
        $region44: #{tpu_custom_call.1} parent=39 // pred_fallthru
          _
      $region40: #{tpu_custom_call.1} parent=5 // pred_fallthru
        _
    $region6: #{tpu_custom_call.1} parent=1 // loop_footer
      %s16 = sadd.s32 1, %s12
    $region7: #{tpu_custom_call.1} parent=1 // loop_footer_branch
      %11 = sbr.rel target = $region3
    $region8: #{tpu_custom_call.1} parent=1 // loop_exit
      _
    %362 = vsyncpa [#allocation3], 1
    %s363 = scalar_lea.sflag [#allocation3], 1
    %364 = vsyncpa %s363, 1

</llo_original>
